<compile_context>
chip_gen: v7x
topology: tpu7x:2x2x1
jax: 0.10.0
libtpu: 0.0.40
codegen_flags: <defaults>
</compile_context>

<pallas_src>
import jax
import jax.numpy as jnp
from jax.experimental import pallas as pl
from jax.experimental.pallas import tpu as pltpu


def _decoder_mlp_kernel(x_ref, w1_ref, rb1_ref, w2_ref, b2_ref,
                        w3_ref, b3k_ref, sum_ref, o_ref):
    """Fused fc1+ReLU, fc2+ReLU, object-sum, fc3 for one row tile.

    x_ref:   (TILE_M, input_dim)   TILE_M = TILE_B * K rows (batch-major, obj-minor)
    w1_ref:  (input_dim, H)        fc1 weight restricted to the `ins` columns
    rb1_ref: (TILE_M, H)           per-row bias = b1 + fc1 weight row of object id
    w2_ref:  (H, H)   b2_ref: (1, H)
    w3_ref:  (H, P_pad)            fc3 weight, zero-padded lane-dense to 128*
    b3k_ref: (1, P_pad)            K * b3 (object-sum folded into the bias)
    sum_ref: (TILE_B, TILE_M)      0/1 matrix summing the K object rows per batch elem
    o_ref:   (TILE_B, P_pad)
    """
    h = jnp.dot(x_ref[...], w1_ref[...], preferred_element_type=jnp.float32)
    h = jnp.maximum(h + rb1_ref[...], 0.0)                       # act1 = ReLU
    h = jnp.dot(h, w2_ref[...], preferred_element_type=jnp.float32)
    h = jnp.maximum(h + b2_ref[...], 0.0)                        # act2 = ReLU
    # Sum over the K objects BEFORE fc3 (fc3 is linear): K x fewer fc3 FLOPs,
    # no 3D reshape / cross-sublane reduce — a tiny MXU matmul instead.
    h_sum = jnp.dot(sum_ref[...], h, preferred_element_type=jnp.float32)
    o_ref[...] = (jnp.dot(h_sum, w3_ref[...], preferred_element_type=jnp.float32)
                  + b3k_ref[...])


def decoder_mlp_forward(ins, params, num_objects, output_size):
    """ins: (B, K, input_dim) float32. Returns (B, C, H, W)."""
    B, K, input_dim = ins.shape
    assert K == num_objects
    w1, b1, w2, b2, w3, b3 = params
    H = w1.shape[1]
    P = w3.shape[1]

    # ---- wrapper-side algebraic restructuring (plain JAX glue) ----
    w1_in = w1[:input_dim]                                        # (input_dim, H)
    w1_obj = w1[input_dim:]                                       # (K, H)

    # Lane-dense output: pad P up to a multiple of 128, slice back afterwards.
    P_pad = ((P + 127) // 128) * 128
    w3_pad = jnp.zeros((H, P_pad), jnp.float32).at[:, :P].set(w3)
    b3k_pad = jnp.zeros((1, P_pad), jnp.float32).at[0, :P].set(K * b3)

    # ---- row grid over the batch dim; weights stay resident in VMEM ----
    if B * K <= 1024:
        TILE_B = B                       # single tile for small problems
    else:
        TILE_B = max(8, (512 // K) // 8 * 8)   # ~512 rows/tile, sublane aligned
    B_pad = ((B + TILE_B - 1) // TILE_B) * TILE_B
    TILE_M = TILE_B * K
    num_tiles = B_pad // TILE_B

    x = ins.reshape(B * K, input_dim).astype(jnp.float32)
    if B_pad != B:
        x = jnp.concatenate(
            [x, jnp.zeros(((B_pad - B) * K, input_dim), x.dtype)], axis=0)

    # Per-row fc1 bias (b1 + object-id embedding row); identical for every tile.
    rb1 = jnp.tile(w1_obj + b1[None, :], (TILE_B, 1))             # (TILE_M, H)
    # 0/1 matrix that sums the K consecutive object rows of each batch element.
    sum_mat = jnp.repeat(jnp.eye(TILE_B, dtype=jnp.float32), K, axis=1)  # (TILE_B, TILE_M)

    resident = lambda i: (0, 0)
    flops = 2 * B_pad * K * (input_dim * H + H * H + H) + 2 * B_pad * H * P_pad
    bytes_accessed = 4 * (x.size + w1_in.size + rb1.size + w2.size + H
                          + w3_pad.size + P_pad + sum_mat.size + B_pad * P_pad)

    out = pl.pallas_call(
        _decoder_mlp_kernel,
        out_shape=jax.ShapeDtypeStruct((B_pad, P_pad), jnp.float32),
        grid=(num_tiles,),
        in_specs=[
            pl.BlockSpec((TILE_M, input_dim), lambda i: (i, 0)),   # activations: tiled
            pl.BlockSpec((input_dim, H), resident),                # w1 (ins part)
            pl.BlockSpec((TILE_M, H), resident),                   # per-row bias
            pl.BlockSpec((H, H), resident),                        # w2
            pl.BlockSpec((1, H), resident),                        # b2
            pl.BlockSpec((H, P_pad), resident),                    # w3 (padded)
            pl.BlockSpec((1, P_pad), resident),                    # K*b3 (padded)
            pl.BlockSpec((TILE_B, TILE_M), resident),              # object-sum matrix
        ],
        out_specs=pl.BlockSpec((TILE_B, P_pad), lambda i: (i, 0)),
        compiler_params=pltpu.CompilerParams(
            dimension_semantics=("parallel",)),
        cost_estimate=pl.CostEstimate(
            flops=flops, transcendentals=0, bytes_accessed=bytes_accessed),
    )(x, w1_in, rb1, w2, b2.reshape(1, H), w3_pad, b3k_pad, sum_mat)

    C, Ho, Wo = output_size
    return out[:B, :P].reshape(B, C, Ho, Wo)


def init_params(key, input_dim, hidden_dim, num_objects, output_size):
    """Deterministic synthetic parameters (shapes match the nn.Linear layers)."""
    P = int(output_size[0] * output_size[1] * output_size[2])
    d_in = input_dim + num_objects
    ks = jax.random.split(key, 6)
    w1 = jax.random.normal(ks[0], (d_in, hidden_dim), jnp.float32) * 0.1
    b1 = jax.random.normal(ks[1], (hidden_dim,), jnp.float32) * 0.01
    w2 = jax.random.normal(ks[2], (hidden_dim, hidden_dim), jnp.float32) * 0.1
    b2 = jax.random.normal(ks[3], (hidden_dim,), jnp.float32) * 0.01
    w3 = jax.random.normal(ks[4], (hidden_dim, P), jnp.float32) * 0.1
    b3 = jax.random.normal(ks[5], (P,), jnp.float32) * 0.01
    return (w1, b1, w2, b2, w3, b3)


def _reference_forward(ins, params, num_objects, output_size):
    """Pure-JAX reference mirroring the PyTorch module exactly."""
    w1, b1, w2, b2, w3, b3 = params
    B, K, _ = ins.shape
    obj_ids = jnp.broadcast_to(jnp.eye(K, dtype=jnp.float32)[None], (B, K, K))
    h = jnp.concatenate([ins, obj_ids], axis=-1)
    h = jax.nn.relu(h @ w1 + b1)
    h = jax.nn.relu(h @ w2 + b2)
    h = (h @ w3 + b3).sum(axis=1)
    C, Ho, Wo = output_size
    return h.reshape(-1, C, Ho, Wo)


if __name__ == "__main__":
    # Small shapes consistent with the module's forward.
    B = 2
    input_dim = 8
    hidden_dim = 32
    num_objects = 4
    output_size = (3, 4, 4)   # (C, H, W) -> prod = 48

    key = jax.random.PRNGKey(0)
    k_ins, k_par = jax.random.split(key)
    ins = jax.random.normal(k_ins, (B, num_objects, input_dim), jnp.float32)
    params = init_params(k_par, input_dim, hidden_dim, num_objects, output_size)

    out = decoder_mlp_forward(ins, params, num_objects, output_size)
    out = jax.block_until_ready(out)

    ref = _reference_forward(ins, params, num_objects, output_size)
    assert out.shape == (B,) + output_size, out.shape
    assert jnp.allclose(out, ref, atol=1e-5, rtol=1e-5), "mismatch vs reference"

    print("KERNEL_OK")
</pallas_src>

<mosaic_0001>
module attributes {stable_mosaic.version = 11 : i64} {
  func.func @_decoder_mlp_kernel(%arg0: i32, %arg1: memref<8x8xf32, #tpu.memory_space<vmem>>, %arg2: memref<8x32xf32, #tpu.memory_space<vmem>>, %arg3: memref<8x32xf32, #tpu.memory_space<vmem>>, %arg4: memref<32x32xf32, #tpu.memory_space<vmem>>, %arg5: memref<1x32xf32, #tpu.memory_space<vmem>>, %arg6: memref<32x128xf32, #tpu.memory_space<vmem>>, %arg7: memref<1x128xf32, #tpu.memory_space<vmem>>, %arg8: memref<2x8xf32, #tpu.memory_space<vmem>>, %arg9: memref<2x128xf32, #tpu.memory_space<vmem>>) attributes {dimension_semantics = [#tpu.dimension_semantics<parallel>], iteration_bounds = array<i64: 1>, scalar_prefetch = 0 : i64, scratch_operands = 0 : i64, tpu.core_type = #tpu.core_type<tc>, window_params = [{transform_indices = @transform_0, window_bounds = array<i64: 8, 8>}, {pipeline_mode = #tpu.pipeline_mode<synchronous>, transform_indices = @transform_1, window_bounds = array<i64: 8, 32>}, {pipeline_mode = #tpu.pipeline_mode<synchronous>, transform_indices = @transform_2, window_bounds = array<i64: 8, 32>}, {pipeline_mode = #tpu.pipeline_mode<synchronous>, transform_indices = @transform_3, window_bounds = array<i64: 32, 32>}, {pipeline_mode = #tpu.pipeline_mode<synchronous>, transform_indices = @transform_4, window_bounds = array<i64: 1, 32>}, {pipeline_mode = #tpu.pipeline_mode<synchronous>, transform_indices = @transform_5, window_bounds = array<i64: 32, 128>}, {pipeline_mode = #tpu.pipeline_mode<synchronous>, transform_indices = @transform_6, window_bounds = array<i64: 1, 128>}, {pipeline_mode = #tpu.pipeline_mode<synchronous>, transform_indices = @transform_7, window_bounds = array<i64: 2, 8>}, {transform_indices = @transform_8, window_bounds = array<i64: 2, 128>}]} {
    %c0 = arith.constant 0 : index
    %c0_0 = arith.constant 0 : index
    %0 = vector.load %arg1[%c0, %c0_0] : memref<8x8xf32, #tpu.memory_space<vmem>>, vector<8x8xf32>
    %c0_1 = arith.constant 0 : index
    %c0_2 = arith.constant 0 : index
    %1 = vector.load %arg2[%c0_1, %c0_2] : memref<8x32xf32, #tpu.memory_space<vmem>>, vector<8x32xf32>
    %cst = arith.constant dense<0.000000e+00> : vector<8x32xf32>
    %2 = tpu.matmul %0, %1, %cst {dimension_numbers = #tpu.dot_dimension_numbers<[1], [0], [0], [1], [0, 0, 1, 1], [], []>} : vector<8x8xf32>, vector<8x32xf32>, vector<8x32xf32> -> vector<8x32xf32>
    %c0_3 = arith.constant 0 : index
    %c0_4 = arith.constant 0 : index
    %3 = vector.load %arg3[%c0_3, %c0_4] : memref<8x32xf32, #tpu.memory_space<vmem>>, vector<8x32xf32>
    %4 = arith.addf %2, %3 : vector<8x32xf32>
    %cst_5 = arith.constant 0.000000e+00 : f32
    %5 = vector.broadcast %cst_5 : f32 to vector<8x32xf32>
    %6 = arith.maximumf %4, %5 : vector<8x32xf32>
    %c0_6 = arith.constant 0 : index
    %c0_7 = arith.constant 0 : index
    %7 = vector.load %arg4[%c0_6, %c0_7] : memref<32x32xf32, #tpu.memory_space<vmem>>, vector<32x32xf32>
    %cst_8 = arith.constant dense<0.000000e+00> : vector<8x32xf32>
    %8 = tpu.matmul %6, %7, %cst_8 {dimension_numbers = #tpu.dot_dimension_numbers<[1], [0], [0], [1], [0, 0, 1, 1], [], []>} : vector<8x32xf32>, vector<32x32xf32>, vector<8x32xf32> -> vector<8x32xf32>
    %c0_9 = arith.constant 0 : index
    %c0_10 = arith.constant 0 : index
    %9 = vector.load %arg5[%c0_9, %c0_10] : memref<1x32xf32, #tpu.memory_space<vmem>>, vector<1x32xf32>
    %10 = vector.broadcast %9 : vector<1x32xf32> to vector<8x32xf32>
    %11 = arith.addf %8, %10 : vector<8x32xf32>
    %cst_11 = arith.constant 0.000000e+00 : f32
    %12 = vector.broadcast %cst_11 : f32 to vector<8x32xf32>
    %13 = arith.maximumf %11, %12 : vector<8x32xf32>
    %c0_12 = arith.constant 0 : index
    %c0_13 = arith.constant 0 : index
    %14 = vector.load %arg8[%c0_12, %c0_13] : memref<2x8xf32, #tpu.memory_space<vmem>>, vector<2x8xf32>
    %cst_14 = arith.constant dense<0.000000e+00> : vector<2x32xf32>
    %15 = tpu.matmul %14, %13, %cst_14 {dimension_numbers = #tpu.dot_dimension_numbers<[1], [0], [0], [1], [0, 0, 1, 1], [], []>} : vector<2x8xf32>, vector<8x32xf32>, vector<2x32xf32> -> vector<2x32xf32>
    %c0_15 = arith.constant 0 : index
    %c0_16 = arith.constant 0 : index
    %16 = vector.load %arg6[%c0_15, %c0_16] : memref<32x128xf32, #tpu.memory_space<vmem>>, vector<32x128xf32>
    %cst_17 = arith.constant dense<0.000000e+00> : vector<2x128xf32>
    %17 = tpu.matmul %15, %16, %cst_17 {dimension_numbers = #tpu.dot_dimension_numbers<[1], [0], [0], [1], [0, 0, 1, 1], [], []>} : vector<2x32xf32>, vector<32x128xf32>, vector<2x128xf32> -> vector<2x128xf32>
    %c0_18 = arith.constant 0 : index
    %c0_19 = arith.constant 0 : index
    %18 = vector.load %arg7[%c0_18, %c0_19] : memref<1x128xf32, #tpu.memory_space<vmem>>, vector<1x128xf32>
    %19 = vector.broadcast %18 : vector<1x128xf32> to vector<2x128xf32>
    %20 = arith.addf %17, %19 : vector<2x128xf32>
    %c0_20 = arith.constant 0 : index
    %c0_21 = arith.constant 0 : index
    %21 = vector.load %arg9[%c0_20, %c0_21] : memref<2x128xf32, #tpu.memory_space<vmem>>, vector<2x128xf32>
    tpu.vector_store %arg9[%c0_20, %c0_21], %20 {strides = array<i32>} : memref<2x128xf32, #tpu.memory_space<vmem>>, vector<2x128xf32>,
    return
  }
  func.func @transform_0(%arg0: i32) -> (i32, i32) {
    %c0_i32 = arith.constant 0 : i32
    %c0_i32_0 = arith.constant 0 : i32
    return %arg0, %c0_i32 : i32, i32
  }
  func.func @transform_1(%arg0: i32) -> (i32, i32) {
    %c0_i32 = arith.constant 0 : i32
    %c0_i32_0 = arith.constant 0 : i32
    %c0_i32_1 = arith.constant 0 : i32
    return %c0_i32, %c0_i32_0 : i32, i32
  }
  func.func @transform_2(%arg0: i32) -> (i32, i32) {
    %c0_i32 = arith.constant 0 : i32
    %c0_i32_0 = arith.constant 0 : i32
    %c0_i32_1 = arith.constant 0 : i32
    return %c0_i32, %c0_i32_0 : i32, i32
  }
  func.func @transform_3(%arg0: i32) -> (i32, i32) {
    %c0_i32 = arith.constant 0 : i32
    %c0_i32_0 = arith.constant 0 : i32
    %c0_i32_1 = arith.constant 0 : i32
    return %c0_i32, %c0_i32_0 : i32, i32
  }
  func.func @transform_4(%arg0: i32) -> (i32, i32) {
    %c0_i32 = arith.constant 0 : i32
    %c0_i32_0 = arith.constant 0 : i32
    %c0_i32_1 = arith.constant 0 : i32
    return %c0_i32, %c0_i32_0 : i32, i32
  }
  func.func @transform_5(%arg0: i32) -> (i32, i32) {
    %c0_i32 = arith.constant 0 : i32
    %c0_i32_0 = arith.constant 0 : i32
    %c0_i32_1 = arith.constant 0 : i32
    return %c0_i32, %c0_i32_0 : i32, i32
  }
  func.func @transform_6(%arg0: i32) -> (i32, i32) {
    %c0_i32 = arith.constant 0 : i32
    %c0_i32_0 = arith.constant 0 : i32
    %c0_i32_1 = arith.constant 0 : i32
    return %c0_i32, %c0_i32_0 : i32, i32
  }
  func.func @transform_7(%arg0: i32) -> (i32, i32) {
    %c0_i32 = arith.constant 0 : i32
    %c0_i32_0 = arith.constant 0 : i32
    %c0_i32_1 = arith.constant 0 : i32
    return %c0_i32, %c0_i32_0 : i32, i32
  }
  func.func @transform_8(%arg0: i32) -> (i32, i32) {
    %c0_i32 = arith.constant 0 : i32
    %c0_i32_0 = arith.constant 0 : i32
    return %arg0, %c0_i32 : i32, i32
  }
}

</mosaic_0001>

<llo_original>
// kernel: tpu_custom_call.1
$region0: #{tpu_custom_call.1}
  #allocation0 [shape = 'u32[]', space=smem, size = 0x4, offset = 0x4, fixed_abs, tag = 'smem constant byte address 0x4 - core index']
  #allocation1 [shape = 'u32[144,128]{1,0:T(1,128)}', space=vmem, size = 0x12000, scoped, tag = 'internal scratch']
  %s0 = inlined_call_operand.hbm [shape: f32[8,8], index: 0, kind: input, shape index: {}]
  %s1 = inlined_call_operand.hbm [shape: f32[8,32], index: 1, kind: input, shape index: {}]
  %s2 = inlined_call_operand.hbm [shape: f32[8,32], index: 2, kind: input, shape index: {}]
  %s3 = inlined_call_operand.hbm [shape: f32[32,32], index: 3, kind: input, shape index: {}]
  %s4 = inlined_call_operand.vmem [shape: f32[1,32], index: 4, kind: input, shape index: {}]
  %s5 = inlined_call_operand.hbm [shape: f32[32,128], index: 5, kind: input, shape index: {}]
  %s6 = inlined_call_operand.vmem [shape: f32[1,128], index: 6, kind: input, shape index: {}]
  %s7 = inlined_call_operand.vmem [shape: f32[2,8], index: 7, kind: input, shape index: {}]
  %s8 = inlined_call_operand.hbm [shape: f32[2,128], index: 8, kind: output, shape index: {}]
  %s9 = sld [smem:[#allocation0]]
  $region62: #{tpu_custom_call.1} parent=0
    _
  %s11 = ssub.s32 1, %s9
  %s12 = scalar_select 0, %s11, %s9
  $region1: #{tpu_custom_call.1} parent=0
    #allocation2 [shape = 'u8[4096]{0}', space=vmem, size = 0x1000, scoped, tag = 'input window, operand 0, single buffered']
    #allocation3 [shape = 's32[1]{0}', space=sflag, size = 0x4, scoped, tag = 'scoped memory for tpu_custom_call.1']
    #allocation4 [shape = 's32[1]{0}', space=sflag, size = 0x4, scoped, tag = 'scoped memory for tpu_custom_call.1']
    #allocation5 [shape = 'u8[4096]{0}', space=vmem, size = 0x1000, scoped, tag = 'input window, operand 1, single buffered']
    #allocation6 [shape = 's32[1]{0}', space=sflag, size = 0x4, scoped, tag = 'scoped memory for tpu_custom_call.1']
    #allocation7 [shape = 'u8[4096]{0}', space=vmem, size = 0x1000, scoped, tag = 'input window, operand 2, single buffered']
    #allocation8 [shape = 'u8[16384]{0}', space=vmem, size = 0x4000, scoped, tag = 'input window, operand 3, single buffered']
    #allocation9 [shape = 's32[1]{0}', space=sflag, size = 0x4, scoped, tag = 'scoped memory for tpu_custom_call.1']
    #allocation10 [shape = 'u8[16384]{0}', space=vmem, size = 0x4000, scoped, tag = 'input window, operand 5, single buffered']
    #allocation11 [shape = 'u8[1024]{0}', space=vmem, size = 0x400, scoped, tag = 'output window, operand 0, single buffered']
    %13 = vsyncpa [#allocation3], 0
    %14 = vsyncpa [#allocation6], 0
    %15 = vsyncpa [#allocation9], 0
    %16 = vsyncpa [#allocation4], 0
    // Predicated region
    $region2: #{tpu_custom_call.1} parent=1 // pred_check
      _
    $region3: #{tpu_custom_call.1} parent=1 // pred_check_branch
      %18 = sbr.rel (0) target = $region5
    $region4: #{tpu_custom_call.1} parent=1 // pred_region
      %s20 = ssub.s32 128, 128
      %21 = vsyncadd [#allocation3], %s20
      %s23 = sshll.u32 [#allocation2], 4
      %s24 = int_to_ptr.vmem [resolvable:$true] %s23
      %26 = dma.hbm_to_vmem [thread:$0]  %s0, 128, %s24, [#allocation3]
    $region5: #{tpu_custom_call.1} parent=1 // pred_fallthru
      _
    // Predicated region
    $region6: #{tpu_custom_call.1} parent=1 // pred_check
      _
    $region7: #{tpu_custom_call.1} parent=1 // pred_check_branch
      %28 = sbr.rel (0) target = $region9
    $region8: #{tpu_custom_call.1} parent=1 // pred_region
      %s30 = ssub.s32 128, 128
      %31 = vsyncadd [#allocation6], %s30
      %s33 = sshll.u32 [#allocation5], 4
      %s34 = int_to_ptr.vmem [resolvable:$true] %s33
      %36 = dma.hbm_to_vmem [thread:$0]  %s1, 128, %s34, [#allocation6]
    $region9: #{tpu_custom_call.1} parent=1 // pred_fallthru
      _
    // Predicated region
    $region10: #{tpu_custom_call.1} parent=1 // pred_check
      _
    $region11: #{tpu_custom_call.1} parent=1 // pred_check_branch
      %38 = sbr.rel (0) target = $region13
    $region12: #{tpu_custom_call.1} parent=1 // pred_region
      %s40 = ssub.s32 128, 128
      %41 = vsyncadd [#allocation6], %s40
      %s43 = sshll.u32 [#allocation7], 4
      %s44 = int_to_ptr.vmem [resolvable:$true] %s43
      %46 = dma.hbm_to_vmem [thread:$0]  %s2, 128, %s44, [#allocation6]
    $region13: #{tpu_custom_call.1} parent=1 // pred_fallthru
      _
    // Predicated region
    $region14: #{tpu_custom_call.1} parent=1 // pred_check
      _
    $region15: #{tpu_custom_call.1} parent=1 // pred_check_branch
      %48 = sbr.rel (0) target = $region17
    $region16: #{tpu_custom_call.1} parent=1 // pred_region
      %s50 = ssub.s32 512, 512
      %51 = vsyncadd [#allocation9], %s50
      %s52 = sshll.u32 [#allocation8], 4
      %s53 = int_to_ptr.vmem [resolvable:$true] %s52
      %58 = dma.hbm_to_vmem [thread:$0]  %s3, 512, %s53, [#allocation9], 128, 128, 8
    $region17: #{tpu_custom_call.1} parent=1 // pred_fallthru
      _
    // Predicated region
    $region18: #{tpu_custom_call.1} parent=1 // pred_check
      _
    $region19: #{tpu_custom_call.1} parent=1 // pred_check_branch
      %60 = sbr.rel (0) target = $region21
    $region20: #{tpu_custom_call.1} parent=1 // pred_region
      _
    $region21: #{tpu_custom_call.1} parent=1 // pred_fallthru
      _
    // Predicated region
    $region22: #{tpu_custom_call.1} parent=1 // pred_check
      _
    $region23: #{tpu_custom_call.1} parent=1 // pred_check_branch
      %62 = sbr.rel (0) target = $region25
    $region24: #{tpu_custom_call.1} parent=1 // pred_region
      %s64 = ssub.s32 512, 512
      %65 = vsyncadd [#allocation9], %s64
      %s66 = sshll.u32 [#allocation10], 4
      %s67 = int_to_ptr.vmem [resolvable:$true] %s66
      %72 = dma.hbm_to_vmem [thread:$0]  %s5, 512, %s67, [#allocation9], 128, 128, 8
    $region25: #{tpu_custom_call.1} parent=1 // pred_fallthru
      _
    // Predicated region
    $region26: #{tpu_custom_call.1} parent=1 // pred_check
      _
    $region27: #{tpu_custom_call.1} parent=1 // pred_check_branch
      %74 = sbr.rel (0) target = $region29
    $region28: #{tpu_custom_call.1} parent=1 // pred_region
      _
    $region29: #{tpu_custom_call.1} parent=1 // pred_fallthru
      _
    // Predicated region
    $region30: #{tpu_custom_call.1} parent=1 // pred_check
      _
    $region31: #{tpu_custom_call.1} parent=1 // pred_check_branch
      %76 = sbr.rel (0) target = $region33
    $region32: #{tpu_custom_call.1} parent=1 // pred_region
      _
    $region33: #{tpu_custom_call.1} parent=1 // pred_fallthru
      _
    // Predicated region
    $region34: #{tpu_custom_call.1} parent=1 // pred_check
      _
    $region35: #{tpu_custom_call.1} parent=1 // pred_check_branch
      %78 = sbr.rel (0) target = $region37
    $region36: #{tpu_custom_call.1} parent=1 // pred_region
      %79 = dma.done [#allocation3], 128
    $region37: #{tpu_custom_call.1} parent=1 // pred_fallthru
      _
    // Predicated region
    $region38: #{tpu_custom_call.1} parent=1 // pred_check
      _
    $region39: #{tpu_custom_call.1} parent=1 // pred_check_branch
      %81 = sbr.rel (0) target = $region41
    $region40: #{tpu_custom_call.1} parent=1 // pred_region
      %82 = dma.done [#allocation6], 128
    $region41: #{tpu_custom_call.1} parent=1 // pred_fallthru
      _
    // Predicated region
    $region42: #{tpu_custom_call.1} parent=1 // pred_check
      _
    $region43: #{tpu_custom_call.1} parent=1 // pred_check_branch
      %84 = sbr.rel (0) target = $region45
    $region44: #{tpu_custom_call.1} parent=1 // pred_region
      %85 = dma.done [#allocation6], 128
    $region45: #{tpu_custom_call.1} parent=1 // pred_fallthru
      _
    // Predicated region
    $region46: #{tpu_custom_call.1} parent=1 // pred_check
      _
    $region47: #{tpu_custom_call.1} parent=1 // pred_check_branch
      %87 = sbr.rel (0) target = $region49
    $region48: #{tpu_custom_call.1} parent=1 // pred_region
      %88 = dma.done [#allocation9], 512
    $region49: #{tpu_custom_call.1} parent=1 // pred_fallthru
      _
    // Predicated region
    $region50: #{tpu_custom_call.1} parent=1 // pred_check
      _
    $region51: #{tpu_custom_call.1} parent=1 // pred_check_branch
      %90 = sbr.rel (0) target = $region53
    $region52: #{tpu_custom_call.1} parent=1 // pred_region
      %91 = dma.done [#allocation9], 512
    $region53: #{tpu_custom_call.1} parent=1 // pred_fallthru
      _
    %v92 = vld [vmem:[#allocation2] sm:$0xff]
    %v93 = vld [vmem:[#allocation5] sm:$0xff]
    %v94 = vld [vmem:[#allocation7] sm:$0xff]
    %vm95 = vcmask 64512
    %v97 = vsel %vm95, %v92, 0
    %99 = vmatprep.subr.mxu0 0.0
    %100 = vmatpush1.msra.mxu0 %v93
    %101 = vmatprep.subr.mxu0 0.0
    %102 = vmatpush1.msra.mxu0 0.0
    %103 = vmatprep.subr.mxu0 0.0
    %104 = vmatpush1.msra.mxu0 0.0
    %105 = vmatprep.subr.mxu0 0.0
    %106 = vmatpush1.msra.mxu0 0.0
    %107 = vmatprep.subr.mxu0 0.0
    %108 = vmatpush1.msra.mxu0 0.0
    %109 = vmatprep.subr.mxu0 0.0
    %110 = vmatpush1.msra.mxu0 0.0
    %111 = vmatprep.subr.mxu0 0.0
    %112 = vmatpush1.msra.mxu0 0.0
    %113 = vmatprep.subr.mxu0 0.0
    %114 = vmatpush1.msra.mxu0 0.0
    %115 = vmatprep.subr.mxu0 0.0
    %116 = vmatpush1.msra.mxu0 0.0
    %117 = vmatprep.subr.mxu0 0.0
    %118 = vmatpush1.msra.mxu0 0.0
    %119 = vmatprep.subr.mxu0 0.0
    %120 = vmatpush1.msra.mxu0 0.0
    %121 = vmatprep.subr.mxu0 0.0
    %122 = vmatpush1.msra.mxu0 0.0
    %123 = vmatprep.subr.mxu0 0.0
    %124 = vmatpush1.msra.mxu0 0.0
    %125 = vmatprep.subr.mxu0 0.0
    %126 = vmatpush1.msra.mxu0 0.0
    %127 = vmatprep.subr.mxu0 0.0
    %128 = vmatpush1.msra.mxu0 0.0
    %129 = vmatprep.subr.mxu0 0.0
    %130 = vmatpush1.msra.mxu0 0.0
    %131 = vmatprep.subr.mxu0 0.0
    %132 = vmatpush1.msra.mxu0 0.0
    %133 = vmatprep.subr.mxu0 0.0
    %134 = vmatpush1.msra.mxu0 0.0
    %135 = vmatprep.subr.mxu0 0.0
    %136 = vmatpush1.msra.mxu0 0.0
    %137 = vmatprep.subr.mxu0 0.0
    %138 = vmatpush1.msra.mxu0 0.0
    %139 = vmatprep.subr.mxu0 0.0
    %140 = vmatpush1.msra.mxu0 0.0
    %141 = vmatprep.subr.mxu0 0.0
    %142 = vmatpush1.msra.mxu0 0.0
    %143 = vmatprep.subr.mxu0 0.0
    %144 = vmatpush1.msra.mxu0 0.0
    %145 = vmatprep.subr.mxu0 0.0
    %146 = vmatpush1.msra.mxu0 0.0
    %147 = vmatprep.subr.mxu0 0.0
    %148 = vmatpush1.msra.mxu0 0.0
    %149 = vmatprep.subr.mxu0 0.0
    %150 = vmatpush1.msra.mxu0 0.0
    %151 = vmatprep.subr.mxu0 0.0
    %152 = vmatpush1.msra.mxu0 0.0
    %153 = vmatprep.subr.mxu0 0.0
    %154 = vmatpush1.msra.mxu0 0.0
    %155 = vmatprep.subr.mxu0 0.0
    %156 = vmatpush1.msra.mxu0 0.0
    %157 = vmatprep.subr.mxu0 0.0
    %158 = vmatpush1.msra.mxu0 0.0
    %159 = vmatprep.subr.mxu0 0.0
    %160 = vmatpush1.msra.mxu0 0.0
    %161 = vmatprep.subr.mxu0 0.0
    %162 = vmatpush1.msra.mxu0 0.0
    %163 = vmatprep.mubr.f32.mxu0 0.0
    %164 = vmatmul.mubr.f32.gmra.mrb[0].mxu0 %v97
    %v165 = vpop.f32.mrb[0].mxu0
    %v166 = vadd.f32 %v94, %v165
    %v167 = vpop.f32.mrb[0].mxu0
    %168 = vdwg.mxu0
    %v169 = vmax.f32 %v166, 0.0
    %v170 = vld [vmem:[#allocation8] sm:$0xff]
    %v171 = vld [vmem:[#allocation8 + $0x8] sm:$0xff]
    %v172 = vld [vmem:[#allocation8 + $0x10] sm:$0xff]
    %v173 = vld [vmem:[#allocation8 + $0x18] sm:$0xff]
    %v174 = vld [vmem:[%s4] sm:$0x1]
    %v176 = vlaneseq
    %v177 = vshrl.u32 %v176, 7
    %v178 = vsub.s32 0, %v177
    %v179 = vrot.slane %v174, %v178
    %vm181 = vcmask 261120
    %v183 = vsel %vm181, %v169, 0
    %185 = vmatprep.subr.mxu0 0.0
    %186 = vmatpush1.msra.mxu0 %v170
    %187 = vmatprep.subr.mxu0 0.0
    %188 = vmatpush1.msra.mxu0 %v171
    %189 = vmatprep.subr.mxu0 0.0
    %190 = vmatpush1.msra.mxu0 %v172
    %191 = vmatprep.subr.mxu0 0.0
    %192 = vmatpush1.msra.mxu0 %v173
    %193 = vmatprep.subr.mxu0 0.0
    %194 = vmatpush1.msra.mxu0 0.0
    %195 = vmatprep.subr.mxu0 0.0
    %196 = vmatpush1.msra.mxu0 0.0
    %197 = vmatprep.subr.mxu0 0.0
    %198 = vmatpush1.msra.mxu0 0.0
    %199 = vmatprep.subr.mxu0 0.0
    %200 = vmatpush1.msra.mxu0 0.0
    %201 = vmatprep.subr.mxu0 0.0
    %202 = vmatpush1.msra.mxu0 0.0
    %203 = vmatprep.subr.mxu0 0.0
    %204 = vmatpush1.msra.mxu0 0.0
    %205 = vmatprep.subr.mxu0 0.0
    %206 = vmatpush1.msra.mxu0 0.0
    %207 = vmatprep.subr.mxu0 0.0
    %208 = vmatpush1.msra.mxu0 0.0
    %209 = vmatprep.subr.mxu0 0.0
    %210 = vmatpush1.msra.mxu0 0.0
    %211 = vmatprep.subr.mxu0 0.0
    %212 = vmatpush1.msra.mxu0 0.0
    %213 = vmatprep.subr.mxu0 0.0
    %214 = vmatpush1.msra.mxu0 0.0
    %215 = vmatprep.subr.mxu0 0.0
    %216 = vmatpush1.msra.mxu0 0.0
    %217 = vmatprep.subr.mxu0 0.0
    %218 = vmatpush1.msra.mxu0 0.0
    %219 = vmatprep.subr.mxu0 0.0
    %220 = vmatpush1.msra.mxu0 0.0
    %221 = vmatprep.subr.mxu0 0.0
    %222 = vmatpush1.msra.mxu0 0.0
    %223 = vmatprep.subr.mxu0 0.0
    %224 = vmatpush1.msra.mxu0 0.0
    %225 = vmatprep.subr.mxu0 0.0
    %226 = vmatpush1.msra.mxu0 0.0
    %227 = vmatprep.subr.mxu0 0.0
    %228 = vmatpush1.msra.mxu0 0.0
    %229 = vmatprep.subr.mxu0 0.0
    %230 = vmatpush1.msra.mxu0 0.0
    %231 = vmatprep.subr.mxu0 0.0
    %232 = vmatpush1.msra.mxu0 0.0
    %233 = vmatprep.subr.mxu0 0.0
    %234 = vmatpush1.msra.mxu0 0.0
    %235 = vmatprep.subr.mxu0 0.0
    %236 = vmatpush1.msra.mxu0 0.0
    %237 = vmatprep.subr.mxu0 0.0
    %238 = vmatpush1.msra.mxu0 0.0
    %239 = vmatprep.subr.mxu0 0.0
    %240 = vmatpush1.msra.mxu0 0.0
    %241 = vmatprep.subr.mxu0 0.0
    %242 = vmatpush1.msra.mxu0 0.0
    %243 = vmatprep.subr.mxu0 0.0
    %244 = vmatpush1.msra.mxu0 0.0
    %245 = vmatprep.subr.mxu0 0.0
    %246 = vmatpush1.msra.mxu0 0.0
    %247 = vmatprep.subr.mxu0 0.0
    %248 = vmatpush1.msra.mxu0 0.0
    %249 = vmatprep.mubr.f32.mxu0 0.0
    %250 = vmatmul.mubr.f32.gmra.mrb[0].mxu0 %v183
    %v251 = vpop.f32.mrb[0].mxu0
    %v252 = vadd.f32 %v179, %v251
    %v253 = vpop.f32.mrb[0].mxu0
    %254 = vdwg.mxu0
    %v255 = vmax.f32 %v252, 0.0
    %v256 = vld [vmem:[%s7] sm:$0x3]
    %v258 = vsel %vm95, %v256, 0
    %260 = vmatprep.subr.mxu0 0.0
    %261 = vmatpush1.msra.mxu0 %v255
    %262 = vmatprep.subr.mxu0 0.0
    %263 = vmatpush1.msra.mxu0 0.0
    %264 = vmatprep.subr.mxu0 0.0
    %265 = vmatpush1.msra.mxu0 0.0
    %266 = vmatprep.subr.mxu0 0.0
    %267 = vmatpush1.msra.mxu0 0.0
    %268 = vmatprep.subr.mxu0 0.0
    %269 = vmatpush1.msra.mxu0 0.0
    %270 = vmatprep.subr.mxu0 0.0
    %271 = vmatpush1.msra.mxu0 0.0
    %272 = vmatprep.subr.mxu0 0.0
    %273 = vmatpush1.msra.mxu0 0.0
    %274 = vmatprep.subr.mxu0 0.0
    %275 = vmatpush1.msra.mxu0 0.0
    %276 = vmatprep.subr.mxu0 0.0
    %277 = vmatpush1.msra.mxu0 0.0
    %278 = vmatprep.subr.mxu0 0.0
    %279 = vmatpush1.msra.mxu0 0.0
    %280 = vmatprep.subr.mxu0 0.0
    %281 = vmatpush1.msra.mxu0 0.0
    %282 = vmatprep.subr.mxu0 0.0
    %283 = vmatpush1.msra.mxu0 0.0
    %284 = vmatprep.subr.mxu0 0.0
    %285 = vmatpush1.msra.mxu0 0.0
    %286 = vmatprep.subr.mxu0 0.0
    %287 = vmatpush1.msra.mxu0 0.0
    %288 = vmatprep.subr.mxu0 0.0
    %289 = vmatpush1.msra.mxu0 0.0
    %290 = vmatprep.subr.mxu0 0.0
    %291 = vmatpush1.msra.mxu0 0.0
    %292 = vmatprep.subr.mxu0 0.0
    %293 = vmatpush1.msra.mxu0 0.0
    %294 = vmatprep.subr.mxu0 0.0
    %295 = vmatpush1.msra.mxu0 0.0
    %296 = vmatprep.subr.mxu0 0.0
    %297 = vmatpush1.msra.mxu0 0.0
    %298 = vmatprep.subr.mxu0 0.0
    %299 = vmatpush1.msra.mxu0 0.0
    %300 = vmatprep.subr.mxu0 0.0
    %301 = vmatpush1.msra.mxu0 0.0
    %302 = vmatprep.subr.mxu0 0.0
    %303 = vmatpush1.msra.mxu0 0.0
    %304 = vmatprep.subr.mxu0 0.0
    %305 = vmatpush1.msra.mxu0 0.0
    %306 = vmatprep.subr.mxu0 0.0
    %307 = vmatpush1.msra.mxu0 0.0
    %308 = vmatprep.subr.mxu0 0.0
    %309 = vmatpush1.msra.mxu0 0.0
    %310 = vmatprep.subr.mxu0 0.0
    %311 = vmatpush1.msra.mxu0 0.0
    %312 = vmatprep.subr.mxu0 0.0
    %313 = vmatpush1.msra.mxu0 0.0
    %314 = vmatprep.subr.mxu0 0.0
    %315 = vmatpush1.msra.mxu0 0.0
    %316 = vmatprep.subr.mxu0 0.0
    %317 = vmatpush1.msra.mxu0 0.0
    %318 = vmatprep.subr.mxu0 0.0
    %319 = vmatpush1.msra.mxu0 0.0
    %320 = vmatprep.subr.mxu0 0.0
    %321 = vmatpush1.msra.mxu0 0.0
    %322 = vmatprep.subr.mxu0 0.0
    %323 = vmatpush1.msra.mxu0 0.0
    %324 = vmatprep.mubr.f32.mxu0 0.0
    %325 = vmatmul.mubr.f32.gmra.mrb[0].mxu0 %v258
    %v326 = vpop.f32.mrb[0].mxu0
    %v327 = vadd.f32 0.0, %v326
    %v328 = vpop.f32.mrb[0].mxu0
    %329 = vdwg.mxu0
    %v330 = vld [vmem:[#allocation10] sm:$0xff]
    %v331 = vld [vmem:[#allocation10 + $0x8] sm:$0xff]
    %v332 = vld [vmem:[#allocation10 + $0x10] sm:$0xff]
    %v333 = vld [vmem:[#allocation10 + $0x18] sm:$0xff]
    %v334 = vld [vmem:[%s6] sm:$0x1]
    %v336 = vlaneseq
    %v337 = vshrl.u32 %v336, 7
    %v338 = vsub.s32 0, %v337
    %v339 = vrot.slane %v334, %v338
    %v342 = vsel %vm181, %v327, 0
    %344 = vmatprep.subr.mxu0 0.0
    %345 = vmatpush1.msra.mxu0 %v330
    %346 = vmatprep.subr.mxu0 0.0
    %347 = vmatpush1.msra.mxu0 %v331
    %348 = vmatprep.subr.mxu0 0.0
    %349 = vmatpush1.msra.mxu0 %v332
    %350 = vmatprep.subr.mxu0 0.0
    %351 = vmatpush1.msra.mxu0 %v333
    %352 = vmatprep.subr.mxu0 0.0
    %353 = vmatpush1.msra.mxu0 0.0
    %354 = vmatprep.subr.mxu0 0.0
    %355 = vmatpush1.msra.mxu0 0.0
    %356 = vmatprep.subr.mxu0 0.0
    %357 = vmatpush1.msra.mxu0 0.0
    %358 = vmatprep.subr.mxu0 0.0
    %359 = vmatpush1.msra.mxu0 0.0
    %360 = vmatprep.subr.mxu0 0.0
    %361 = vmatpush1.msra.mxu0 0.0
    %362 = vmatprep.subr.mxu0 0.0
    %363 = vmatpush1.msra.mxu0 0.0
    %364 = vmatprep.subr.mxu0 0.0
    %365 = vmatpush1.msra.mxu0 0.0
    %366 = vmatprep.subr.mxu0 0.0
    %367 = vmatpush1.msra.mxu0 0.0
    %368 = vmatprep.subr.mxu0 0.0
    %369 = vmatpush1.msra.mxu0 0.0
    %370 = vmatprep.subr.mxu0 0.0
    %371 = vmatpush1.msra.mxu0 0.0
    %372 = vmatprep.subr.mxu0 0.0
    %373 = vmatpush1.msra.mxu0 0.0
    %374 = vmatprep.subr.mxu0 0.0
    %375 = vmatpush1.msra.mxu0 0.0
    %376 = vmatprep.subr.mxu0 0.0
    %377 = vmatpush1.msra.mxu0 0.0
    %378 = vmatprep.subr.mxu0 0.0
    %379 = vmatpush1.msra.mxu0 0.0
    %380 = vmatprep.subr.mxu0 0.0
    %381 = vmatpush1.msra.mxu0 0.0
    %382 = vmatprep.subr.mxu0 0.0
    %383 = vmatpush1.msra.mxu0 0.0
    %384 = vmatprep.subr.mxu0 0.0
    %385 = vmatpush1.msra.mxu0 0.0
    %386 = vmatprep.subr.mxu0 0.0
    %387 = vmatpush1.msra.mxu0 0.0
    %388 = vmatprep.subr.mxu0 0.0
    %389 = vmatpush1.msra.mxu0 0.0
    %390 = vmatprep.subr.mxu0 0.0
    %391 = vmatpush1.msra.mxu0 0.0
    %392 = vmatprep.subr.mxu0 0.0
    %393 = vmatpush1.msra.mxu0 0.0
    %394 = vmatprep.subr.mxu0 0.0
    %395 = vmatpush1.msra.mxu0 0.0
    %396 = vmatprep.subr.mxu0 0.0
    %397 = vmatpush1.msra.mxu0 0.0
    %398 = vmatprep.subr.mxu0 0.0
    %399 = vmatpush1.msra.mxu0 0.0
    %400 = vmatprep.subr.mxu0 0.0
    %401 = vmatpush1.msra.mxu0 0.0
    %402 = vmatprep.subr.mxu0 0.0
    %403 = vmatpush1.msra.mxu0 0.0
    %404 = vmatprep.subr.mxu0 0.0
    %405 = vmatpush1.msra.mxu0 0.0
    %406 = vmatprep.subr.mxu0 0.0
    %407 = vmatpush1.msra.mxu0 0.0
    %408 = vmatprep.mubr.f32.mxu0 0.0
    %409 = vmatmul.mubr.f32.gmra.mrb[0].mxu0 %v342
    %v410 = vpop.f32.mrb[0].mxu0
    %v411 = vadd.f32 %v339, %v410
    %v412 = vpop.f32.mrb[0].mxu0
    %413 = vdwg.mxu0
    %414 = vst [vmem:[#allocation11] sm:$0x3] %v411
    // Predicated region
    $region54: #{tpu_custom_call.1} parent=1 // pred_check
      _
    $region55: #{tpu_custom_call.1} parent=1 // pred_check_branch
      %416 = sbr.rel (0) target = $region57
    $region56: #{tpu_custom_call.1} parent=1 // pred_region
      %s418 = ssub.s32 32, 32
      %419 = vsyncadd [#allocation4], %s418
      %s421 = sshll.u32 [#allocation11], 4
      %s422 = int_to_ptr.vmem [resolvable:$true] %s421
      %424 = dma.vmem_to_hbm [thread:$0]  %s422, 32, %s8, [#allocation4]
    $region57: #{tpu_custom_call.1} parent=1 // pred_fallthru
      _
    // Predicated region
    $region58: #{tpu_custom_call.1} parent=1 // pred_check
      _
    $region59: #{tpu_custom_call.1} parent=1 // pred_check_branch
      %426 = sbr.rel (0) target = $region61
    $region60: #{tpu_custom_call.1} parent=1 // pred_region
      %427 = dma.done [#allocation4], 32
    $region61: #{tpu_custom_call.1} parent=1 // pred_fallthru
      _
    %428 = vsyncpa [#allocation3], 1
    %429 = vsyncpa [#allocation6], 1
    %430 = vsyncpa [#allocation9], 1
    %431 = vsyncpa [#allocation4], 1

</llo_original>
